<compile_context>
chip_gen: v5e
topology: v5e:2x2
jax: 0.10.0
libtpu: 0.0.40
codegen_flags: <defaults>
</compile_context>

<pallas_src>
import jax
import jax.numpy as jnp
from jax.experimental import pallas as pl
from jax.experimental.pallas import tpu as pltpu


def moe_kernel(x_ref, wg_ref, bg_ref, wef_ref, rep_ref, sel_ref, bet_ref,
               wo_ref, bo_ref, o_ref):
    x = x_ref[...]                                                     # [Tt, D]

    # --- gate: softmax(x @ Wg + bg) over experts ------------------------------
    logits = jnp.dot(x, wg_ref[...], preferred_element_type=jnp.float32) + bg_ref[...]
    logits = logits - jnp.max(logits, axis=-1, keepdims=True)
    expp = jnp.exp(logits)
    denom = jnp.sum(expp, axis=-1, keepdims=True)
    gate = expp * pl.reciprocal(denom, approx=True)                    # [Tt, E] (EUP recip)

    # --- all experts fused into one lane-dense MXU contraction ----------------
    # h[t, e*F + j] = (x @ We[e])[t, j]
    h = jnp.dot(x, wef_ref[...], preferred_element_type=jnp.float32)   # [Tt, E*F]

    # weighted[t, e] = sum_j gate[t, j] * (h[t, e*F + j] + be[e, j])
    #   gate_rep = gate @ rep  replicates gate across each expert's F lanes,
    #   (h * gate_rep) @ sel   does the per-expert group sum as a matmul,
    #   gate @ be.T            folds in the expert biases.
    gate_rep = jnp.dot(gate, rep_ref[...], preferred_element_type=jnp.float32)   # [Tt, E*F]
    weighted = jnp.dot(h * gate_rep, sel_ref[...], preferred_element_type=jnp.float32)  # [Tt, E]
    weighted = weighted + jnp.dot(gate, bet_ref[...], preferred_element_type=jnp.float32)

    # relu; dropout is identity at inference.
    # TODO(synk): train-mode dropout would use pltpu.prng_seed / prng_random_bits.
    weighted = jnp.maximum(weighted, 0.0)

    # --- output projection -----------------------------------------------------
    out = jnp.dot(weighted.astype(wo_ref.dtype), wo_ref[...],
                  preferred_element_type=jnp.float32) + bo_ref[...]
    o_ref[...] = out.astype(o_ref.dtype)


def moe_forward(x, params, *, token_tile=256, mxu_dtype=None):
    """MoE forward. token_tile: 256 for v6e/v7x, 128 recommended on v5e.

    mxu_dtype: optionally cast x and weight matrices (e.g. jnp.bfloat16) for
    full-rate MXU on v6e/v7x; accumulation stays float32.
    """
    Wg, bg, We, be, Wo, bo = params
    B, S, D = x.shape
    E, D2, F = We.shape
    assert D2 == D
    assert E == F, "reference einsum 'bse,bsef->bsf' requires num_experts == d_ff"
    out_dtype = x.dtype
    T = B * S

    # --- one-time XLA-side layout plumbing (never inside the kernel) ----------
    We_flat = jnp.transpose(We, (1, 0, 2)).reshape(D, E * F)    # [D, E*F], lane-dense
    be_t = be.T                                                 # [F, E] (bias fold matmul)
    rep = jnp.tile(jnp.eye(F, dtype=jnp.float32), (1, E))       # [F, E*F]: gate replication
    sel = jnp.repeat(jnp.eye(E, dtype=jnp.float32), F, axis=0)  # [E*F, E]: per-expert group sum

    if mxu_dtype is not None:
        x = x.astype(mxu_dtype)
        Wg = Wg.astype(mxu_dtype)
        We_flat = We_flat.astype(mxu_dtype)
        Wo = Wo.astype(mxu_dtype)

    # --- token tiling: big tiles to fill the MXU M dim & amortize grid overhead
    tile = int(token_tile)
    if T < tile:
        tile = max(8, -(-T // 8) * 8)       # clamp tiny inputs to a sublane multiple
    n_steps = -(-T // tile)
    T_pad = n_steps * tile

    xf = x.reshape(T, D)
    if T_pad != T:
        xf = jnp.pad(xf, ((0, T_pad - T), (0, 0)))   # padded tokens are sliced off below

    # --- explicit VMEM budget (weights double-buffered by default + x/out tiles)
    w_bytes = sum(int(a.size) * a.dtype.itemsize for a in (Wg, We_flat, Wo, rep, sel))
    w_bytes += int(bg.size + be_t.size + bo.size) * 4
    io_bytes = 2 * 2 * tile * D * 4
    vmem_limit = int(min(64 * 1024 * 1024,                      # safe on v7x (64 MiB physical)
                         max(32 * 1024 * 1024, 4 * (2 * w_bytes + io_bytes))))
    # TODO(synk): if We_flat ever exceeds this budget (large d_model*d_ff), add a
    # second "arbitrary" grid axis over D with an f32 accumulator scratch.

    out = pl.pallas_call(
        moe_kernel,
        out_shape=jax.ShapeDtypeStruct((T_pad, D), out_dtype),
        grid_spec=pltpu.PrefetchScalarGridSpec(
            num_scalar_prefetch=0,
            grid=(n_steps,),
            in_specs=[
                pl.BlockSpec((tile, D), lambda i: (i, 0)),      # x tokens
                pl.BlockSpec((D, E), lambda i: (0, 0)),         # gate weight
                pl.BlockSpec((1, E), lambda i: (0, 0)),         # gate bias
                pl.BlockSpec((D, E * F), lambda i: (0, 0)),     # fused expert weights
                pl.BlockSpec((F, E * F), lambda i: (0, 0)),     # gate replication matrix
                pl.BlockSpec((E * F, E), lambda i: (0, 0)),     # per-expert group-sum matrix
                pl.BlockSpec((F, E), lambda i: (0, 0)),         # expert biases (transposed)
                pl.BlockSpec((F, D), lambda i: (0, 0)),         # output weight
                pl.BlockSpec((1, D), lambda i: (0, 0)),         # output bias
            ],
            out_specs=pl.BlockSpec((tile, D), lambda i: (i, 0)),
        ),
        compiler_params=pltpu.CompilerParams(
            dimension_semantics=("parallel",),   # shards steps across v7x's 2 TCs when n_steps >= 2
            vmem_limit_bytes=vmem_limit,
        ),
    )(xf, Wg, bg.reshape(1, E), We_flat, rep, sel, be_t, Wo, bo.reshape(1, D))

    return out[:T].reshape(B, S, D)


def init_params(key, d_model, d_ff, num_experts):
    """Deterministic PyTorch-Linear-style uniform init (weights stored input-major)."""
    ks = jax.random.split(key, 6)

    def lin(k, fan_in, shape):
        bound = 1.0 / (fan_in ** 0.5)
        return jax.random.uniform(k, shape, jnp.float32, -bound, bound)

    Wg = lin(ks[0], d_model, (d_model, num_experts))
    bg = lin(ks[1], d_model, (num_experts,))
    We = lin(ks[2], d_model, (num_experts, d_model, d_ff))
    be = lin(ks[3], d_model, (num_experts, d_ff))
    Wo = lin(ks[4], d_ff, (d_ff, d_model))
    bo = lin(ks[5], d_ff, (d_model,))
    return Wg, bg, We, be, Wo, bo


def moe_ref(x, params):
    """Pure-JAX reference reproducing the PyTorch forward exactly (eval mode)."""
    Wg, bg, We, be, Wo, bo = params
    gate = jax.nn.softmax(x @ Wg + bg, axis=-1)                          # [B,S,E]
    stacked = jnp.einsum('bsd,edf->bsfe', x, We) + be.T[None, None]      # [B,S,F,E]
    weighted = jnp.einsum('bse,bsef->bsf', gate, stacked)                # [B,S,E]
    weighted = jax.nn.relu(weighted)                                     # dropout = identity (eval)
    return weighted @ Wo + bo                                            # [B,S,D]


if __name__ == "__main__":
    B, S, D_MODEL, D_FF = 2, 8, 32, 8
    NUM_EXPERTS = D_FF  # required by the reference einsum's shape constraints

    key = jax.random.PRNGKey(0)
    kx, kp = jax.random.split(key)
    x = jax.random.normal(kx, (B, S, D_MODEL), jnp.float32)
    params = init_params(kp, D_MODEL, D_FF, NUM_EXPERTS)

    ref = moe_ref(x, params)

    # Default (large-tile) config; the tile clamps to T=16 at this toy size.
    out = jax.block_until_ready(moe_forward(x, params))
    assert out.shape == (B, S, D_MODEL)
    # Tolerance 2e-3: the gate softmax uses the EUP approximate reciprocal.
    assert jnp.allclose(out, ref, atol=2e-3, rtol=2e-3), float(jnp.max(jnp.abs(out - ref)))

    # Also exercise the multi-step grid path.
    out2 = jax.block_until_ready(moe_forward(x, params, token_tile=8))
    assert jnp.allclose(out2, ref, atol=2e-3, rtol=2e-3), float(jnp.max(jnp.abs(out2 - ref)))

    print("KERNEL_OK")
</pallas_src>

<mosaic_0001>
module attributes {stable_mosaic.version = 11 : i64} {
  func.func @moe_kernel(%arg0: i32, %arg1: memref<16x32xf32, #tpu.memory_space<vmem>>, %arg2: memref<32x8xf32, #tpu.memory_space<vmem>>, %arg3: memref<1x8xf32, #tpu.memory_space<vmem>>, %arg4: memref<32x64xf32, #tpu.memory_space<vmem>>, %arg5: memref<8x64xf32, #tpu.memory_space<vmem>>, %arg6: memref<64x8xf32, #tpu.memory_space<vmem>>, %arg7: memref<8x8xf32, #tpu.memory_space<vmem>>, %arg8: memref<8x32xf32, #tpu.memory_space<vmem>>, %arg9: memref<1x32xf32, #tpu.memory_space<vmem>>, %arg10: memref<16x32xf32, #tpu.memory_space<vmem>>) attributes {dimension_semantics = [#tpu.dimension_semantics<parallel>], iteration_bounds = array<i64: 1>, scalar_prefetch = 0 : i64, scratch_operands = 0 : i64, tpu.core_type = #tpu.core_type<tc>, window_params = [{transform_indices = @transform_0, window_bounds = array<i64: 16, 32>}, {pipeline_mode = #tpu.pipeline_mode<synchronous>, transform_indices = @transform_1, window_bounds = array<i64: 32, 8>}, {pipeline_mode = #tpu.pipeline_mode<synchronous>, transform_indices = @transform_2, window_bounds = array<i64: 1, 8>}, {pipeline_mode = #tpu.pipeline_mode<synchronous>, transform_indices = @transform_3, window_bounds = array<i64: 32, 64>}, {pipeline_mode = #tpu.pipeline_mode<synchronous>, transform_indices = @transform_4, window_bounds = array<i64: 8, 64>}, {pipeline_mode = #tpu.pipeline_mode<synchronous>, transform_indices = @transform_5, window_bounds = array<i64: 64, 8>}, {pipeline_mode = #tpu.pipeline_mode<synchronous>, transform_indices = @transform_6, window_bounds = array<i64: 8, 8>}, {pipeline_mode = #tpu.pipeline_mode<synchronous>, transform_indices = @transform_7, window_bounds = array<i64: 8, 32>}, {pipeline_mode = #tpu.pipeline_mode<synchronous>, transform_indices = @transform_8, window_bounds = array<i64: 1, 32>}, {transform_indices = @transform_9, window_bounds = array<i64: 16, 32>}]} {
    %c0 = arith.constant 0 : index
    %c0_0 = arith.constant 0 : index
    %0 = vector.load %arg1[%c0, %c0_0] : memref<16x32xf32, #tpu.memory_space<vmem>>, vector<16x32xf32>
    %c0_1 = arith.constant 0 : index
    %c0_2 = arith.constant 0 : index
    %1 = vector.load %arg2[%c0_1, %c0_2] : memref<32x8xf32, #tpu.memory_space<vmem>>, vector<32x8xf32>
    %cst = arith.constant dense<0.000000e+00> : vector<16x8xf32>
    %2 = tpu.matmul %0, %1, %cst {dimension_numbers = #tpu.dot_dimension_numbers<[1], [0], [0], [1], [0, 0, 1, 1], [], []>} : vector<16x32xf32>, vector<32x8xf32>, vector<16x8xf32> -> vector<16x8xf32>
    %c0_3 = arith.constant 0 : index
    %c0_4 = arith.constant 0 : index
    %3 = vector.load %arg3[%c0_3, %c0_4] : memref<1x8xf32, #tpu.memory_space<vmem>>, vector<1x8xf32>
    %4 = vector.broadcast %3 : vector<1x8xf32> to vector<16x8xf32>
    %5 = arith.addf %2, %4 : vector<16x8xf32>
    %cst_5 = arith.constant dense<0xFF800000> : vector<16xf32>
    %6 = vector.multi_reduction <maximumf>, %5, %cst_5 [1] : vector<16x8xf32> to vector<16xf32>
    %7 = vector.shape_cast %6 : vector<16xf32> to vector<16x1xf32>
    %8 = vector.broadcast %7 : vector<16x1xf32> to vector<16x8xf32>
    %9 = arith.subf %5, %8 : vector<16x8xf32>
    %10 = math.exp %9 : vector<16x8xf32>
    %cst_6 = arith.constant dense<0.000000e+00> : vector<16xf32>
    %11 = vector.multi_reduction <add>, %10, %cst_6 [1] : vector<16x8xf32> to vector<16xf32>
    %12 = vector.shape_cast %11 : vector<16xf32> to vector<16x1xf32>
    %13 = tpu.reciprocal %12 {approx = true} : vector<16x1xf32> -> vector<16x1xf32>
    %14 = vector.broadcast %13 : vector<16x1xf32> to vector<16x8xf32>
    %15 = arith.mulf %10, %14 : vector<16x8xf32>
    %c0_7 = arith.constant 0 : index
    %c0_8 = arith.constant 0 : index
    %16 = vector.load %arg4[%c0_7, %c0_8] : memref<32x64xf32, #tpu.memory_space<vmem>>, vector<32x64xf32>
    %cst_9 = arith.constant dense<0.000000e+00> : vector<16x64xf32>
    %17 = tpu.matmul %0, %16, %cst_9 {dimension_numbers = #tpu.dot_dimension_numbers<[1], [0], [0], [1], [0, 0, 1, 1], [], []>} : vector<16x32xf32>, vector<32x64xf32>, vector<16x64xf32> -> vector<16x64xf32>
    %c0_10 = arith.constant 0 : index
    %c0_11 = arith.constant 0 : index
    %18 = vector.load %arg5[%c0_10, %c0_11] : memref<8x64xf32, #tpu.memory_space<vmem>>, vector<8x64xf32>
    %cst_12 = arith.constant dense<0.000000e+00> : vector<16x64xf32>
    %19 = tpu.matmul %15, %18, %cst_12 {dimension_numbers = #tpu.dot_dimension_numbers<[1], [0], [0], [1], [0, 0, 1, 1], [], []>} : vector<16x8xf32>, vector<8x64xf32>, vector<16x64xf32> -> vector<16x64xf32>
    %20 = arith.mulf %17, %19 : vector<16x64xf32>
    %c0_13 = arith.constant 0 : index
    %c0_14 = arith.constant 0 : index
    %21 = vector.load %arg6[%c0_13, %c0_14] : memref<64x8xf32, #tpu.memory_space<vmem>>, vector<64x8xf32>
    %cst_15 = arith.constant dense<0.000000e+00> : vector<16x8xf32>
    %22 = tpu.matmul %20, %21, %cst_15 {dimension_numbers = #tpu.dot_dimension_numbers<[1], [0], [0], [1], [0, 0, 1, 1], [], []>} : vector<16x64xf32>, vector<64x8xf32>, vector<16x8xf32> -> vector<16x8xf32>
    %c0_16 = arith.constant 0 : index
    %c0_17 = arith.constant 0 : index
    %23 = vector.load %arg7[%c0_16, %c0_17] : memref<8x8xf32, #tpu.memory_space<vmem>>, vector<8x8xf32>
    %cst_18 = arith.constant dense<0.000000e+00> : vector<16x8xf32>
    %24 = tpu.matmul %15, %23, %cst_18 {dimension_numbers = #tpu.dot_dimension_numbers<[1], [0], [0], [1], [0, 0, 1, 1], [], []>} : vector<16x8xf32>, vector<8x8xf32>, vector<16x8xf32> -> vector<16x8xf32>
    %25 = arith.addf %22, %24 : vector<16x8xf32>
    %cst_19 = arith.constant 0.000000e+00 : f32
    %26 = vector.broadcast %cst_19 : f32 to vector<16x8xf32>
    %27 = arith.maximumf %25, %26 : vector<16x8xf32>
    %c0_20 = arith.constant 0 : index
    %c0_21 = arith.constant 0 : index
    %28 = vector.load %arg8[%c0_20, %c0_21] : memref<8x32xf32, #tpu.memory_space<vmem>>, vector<8x32xf32>
    %cst_22 = arith.constant dense<0.000000e+00> : vector<16x32xf32>
    %29 = tpu.matmul %27, %28, %cst_22 {dimension_numbers = #tpu.dot_dimension_numbers<[1], [0], [0], [1], [0, 0, 1, 1], [], []>} : vector<16x8xf32>, vector<8x32xf32>, vector<16x32xf32> -> vector<16x32xf32>
    %c0_23 = arith.constant 0 : index
    %c0_24 = arith.constant 0 : index
    %30 = vector.load %arg9[%c0_23, %c0_24] : memref<1x32xf32, #tpu.memory_space<vmem>>, vector<1x32xf32>
    %31 = vector.broadcast %30 : vector<1x32xf32> to vector<16x32xf32>
    %32 = arith.addf %29, %31 : vector<16x32xf32>
    %c0_25 = arith.constant 0 : index
    %c0_26 = arith.constant 0 : index
    %33 = vector.load %arg10[%c0_25, %c0_26] : memref<16x32xf32, #tpu.memory_space<vmem>>, vector<16x32xf32>
    tpu.vector_store %arg10[%c0_25, %c0_26], %32 {strides = array<i32>} : memref<16x32xf32, #tpu.memory_space<vmem>>, vector<16x32xf32>,
    return
  }
  func.func @transform_0(%arg0: i32) -> (i32, i32) {
    %c0_i32 = arith.constant 0 : i32
    %c0_i32_0 = arith.constant 0 : i32
    return %arg0, %c0_i32 : i32, i32
  }
  func.func @transform_1(%arg0: i32) -> (i32, i32) {
    %c0_i32 = arith.constant 0 : i32
    %c0_i32_0 = arith.constant 0 : i32
    %c0_i32_1 = arith.constant 0 : i32
    return %c0_i32, %c0_i32_0 : i32, i32
  }
  func.func @transform_2(%arg0: i32) -> (i32, i32) {
    %c0_i32 = arith.constant 0 : i32
    %c0_i32_0 = arith.constant 0 : i32
    %c0_i32_1 = arith.constant 0 : i32
    return %c0_i32, %c0_i32_0 : i32, i32
  }
  func.func @transform_3(%arg0: i32) -> (i32, i32) {
    %c0_i32 = arith.constant 0 : i32
    %c0_i32_0 = arith.constant 0 : i32
    %c0_i32_1 = arith.constant 0 : i32
    return %c0_i32, %c0_i32_0 : i32, i32
  }
  func.func @transform_4(%arg0: i32) -> (i32, i32) {
    %c0_i32 = arith.constant 0 : i32
    %c0_i32_0 = arith.constant 0 : i32
    %c0_i32_1 = arith.constant 0 : i32
    return %c0_i32, %c0_i32_0 : i32, i32
  }
  func.func @transform_5(%arg0: i32) -> (i32, i32) {
    %c0_i32 = arith.constant 0 : i32
    %c0_i32_0 = arith.constant 0 : i32
    %c0_i32_1 = arith.constant 0 : i32
    return %c0_i32, %c0_i32_0 : i32, i32
  }
  func.func @transform_6(%arg0: i32) -> (i32, i32) {
    %c0_i32 = arith.constant 0 : i32
    %c0_i32_0 = arith.constant 0 : i32
    %c0_i32_1 = arith.constant 0 : i32
    return %c0_i32, %c0_i32_0 : i32, i32
  }
  func.func @transform_7(%arg0: i32) -> (i32, i32) {
    %c0_i32 = arith.constant 0 : i32
    %c0_i32_0 = arith.constant 0 : i32
    %c0_i32_1 = arith.constant 0 : i32
    return %c0_i32, %c0_i32_0 : i32, i32
  }
  func.func @transform_8(%arg0: i32) -> (i32, i32) {
    %c0_i32 = arith.constant 0 : i32
    %c0_i32_0 = arith.constant 0 : i32
    %c0_i32_1 = arith.constant 0 : i32
    return %c0_i32, %c0_i32_0 : i32, i32
  }
  func.func @transform_9(%arg0: i32) -> (i32, i32) {
    %c0_i32 = arith.constant 0 : i32
    %c0_i32_0 = arith.constant 0 : i32
    return %arg0, %c0_i32 : i32, i32
  }
}

</mosaic_0001>

<llo_original>
// kernel: tpu_custom_call.1
$region0: #{tpu_custom_call.1}
  #allocation0 [shape = 'u32[]', space=smem, size = 0x4, offset = 0x4, fixed_abs, tag = 'smem constant byte address 0x4 - core index']
  #allocation1 [shape = 'u32[72,128]{1,0:T(1,128)}', space=vmem, size = 0x9000, scoped, tag = 'internal scratch']
  %s0 = inlined_call_operand.vmem [shape: f32[16,32], index: 0, kind: input, shape index: {}]
  %s1 = inlined_call_operand.vmem [shape: f32[32,8], index: 1, kind: input, shape index: {}]
  %s2 = inlined_call_operand.vmem [shape: f32[1,8], index: 2, kind: input, shape index: {}]
  %s3 = inlined_call_operand.vmem [shape: f32[32,64], index: 3, kind: input, shape index: {}]
  %s4 = inlined_call_operand.vmem [shape: f32[8,64], index: 4, kind: input, shape index: {}]
  %s5 = inlined_call_operand.vmem [shape: f32[64,8], index: 5, kind: input, shape index: {}]
  %s6 = inlined_call_operand.vmem [shape: f32[8,8], index: 6, kind: input, shape index: {}]
  %s7 = inlined_call_operand.vmem [shape: f32[8,32], index: 7, kind: input, shape index: {}]
  %s8 = inlined_call_operand.vmem [shape: f32[1,32], index: 8, kind: input, shape index: {}]
  %s9 = inlined_call_operand.hbm [shape: f32[16,32], index: 9, kind: output, shape index: {}]
  %s10 = sld [smem:[#allocation0]]
  $region46: #{tpu_custom_call.1} parent=0
    _
  %s12 = ssub.s32 1, %s10
  %s13 = scalar_select 0, %s12, %s10
  $region1: #{tpu_custom_call.1} parent=0
    #allocation2 [shape = 'u8[8192]{0}', space=vmem, size = 0x2000, scoped, tag = 'output window, operand 0, single buffered']
    #allocation3 [shape = 's32[1]{0}', space=sflag, size = 0x4, scoped, tag = 'scoped memory for tpu_custom_call.1']
    %14 = vsyncpa [#allocation3], 0
    // Predicated region
    $region2: #{tpu_custom_call.1} parent=1 // pred_check
      _
    $region3: #{tpu_custom_call.1} parent=1 // pred_check_branch
      %16 = sbr.rel (0) target = $region5
    $region4: #{tpu_custom_call.1} parent=1 // pred_region
      _
    $region5: #{tpu_custom_call.1} parent=1 // pred_fallthru
      _
    // Predicated region
    $region6: #{tpu_custom_call.1} parent=1 // pred_check
      _
    $region7: #{tpu_custom_call.1} parent=1 // pred_check_branch
      %18 = sbr.rel (0) target = $region9
    $region8: #{tpu_custom_call.1} parent=1 // pred_region
      _
    $region9: #{tpu_custom_call.1} parent=1 // pred_fallthru
      _
    // Predicated region
    $region10: #{tpu_custom_call.1} parent=1 // pred_check
      _
    $region11: #{tpu_custom_call.1} parent=1 // pred_check_branch
      %20 = sbr.rel (0) target = $region13
    $region12: #{tpu_custom_call.1} parent=1 // pred_region
      _
    $region13: #{tpu_custom_call.1} parent=1 // pred_fallthru
      _
    // Predicated region
    $region14: #{tpu_custom_call.1} parent=1 // pred_check
      _
    $region15: #{tpu_custom_call.1} parent=1 // pred_check_branch
      %22 = sbr.rel (0) target = $region17
    $region16: #{tpu_custom_call.1} parent=1 // pred_region
      _
    $region17: #{tpu_custom_call.1} parent=1 // pred_fallthru
      _
    // Predicated region
    $region18: #{tpu_custom_call.1} parent=1 // pred_check
      _
    $region19: #{tpu_custom_call.1} parent=1 // pred_check_branch
      %24 = sbr.rel (0) target = $region21
    $region20: #{tpu_custom_call.1} parent=1 // pred_region
      _
    $region21: #{tpu_custom_call.1} parent=1 // pred_fallthru
      _
    // Predicated region
    $region22: #{tpu_custom_call.1} parent=1 // pred_check
      _
    $region23: #{tpu_custom_call.1} parent=1 // pred_check_branch
      %26 = sbr.rel (0) target = $region25
    $region24: #{tpu_custom_call.1} parent=1 // pred_region
      _
    $region25: #{tpu_custom_call.1} parent=1 // pred_fallthru
      _
    // Predicated region
    $region26: #{tpu_custom_call.1} parent=1 // pred_check
      _
    $region27: #{tpu_custom_call.1} parent=1 // pred_check_branch
      %28 = sbr.rel (0) target = $region29
    $region28: #{tpu_custom_call.1} parent=1 // pred_region
      _
    $region29: #{tpu_custom_call.1} parent=1 // pred_fallthru
      _
    // Predicated region
    $region30: #{tpu_custom_call.1} parent=1 // pred_check
      _
    $region31: #{tpu_custom_call.1} parent=1 // pred_check_branch
      %30 = sbr.rel (0) target = $region33
    $region32: #{tpu_custom_call.1} parent=1 // pred_region
      _
    $region33: #{tpu_custom_call.1} parent=1 // pred_fallthru
      _
    // Predicated region
    $region34: #{tpu_custom_call.1} parent=1 // pred_check
      _
    $region35: #{tpu_custom_call.1} parent=1 // pred_check_branch
      %32 = sbr.rel (0) target = $region37
    $region36: #{tpu_custom_call.1} parent=1 // pred_region
      _
    $region37: #{tpu_custom_call.1} parent=1 // pred_fallthru
      _
    %v33 = vld [vmem:[%s0] sm:$0xff]
    %v34 = vld [vmem:[%s0 + $0x8] sm:$0xff]
    %v35 = vld [vmem:[%s1] sm:$0xff]
    %v36 = vld [vmem:[%s1 + $0x8] sm:$0xff]
    %v37 = vld [vmem:[%s1 + $0x10] sm:$0xff]
    %v38 = vld [vmem:[%s1 + $0x18] sm:$0xff]
    %v39 = vld [vmem:[%s2] sm:$0x1]
    %v41 = vperm.slane %v39, 0
    %vm43 = vcmask 261120
    %v45 = vsel %vm43, %v33, 0
    %v48 = vsel %vm43, %v34, 0
    %50 = vmatpush.msra.mxu0 0.0
    %51 = vmatpush.msra.mxu0 0.0
    %52 = vmatpush.msra.mxu0 0.0
    %53 = vmatpush.msra.mxu0 0.0
    %54 = vmatpush.msra.mxu0 0.0
    %55 = vmatpush.msra.mxu0 0.0
    %56 = vmatpush.msra.mxu0 0.0
    %57 = vmatpush.msra.mxu0 0.0
    %58 = vmatpush.msra.mxu0 0.0
    %59 = vmatpush.msra.mxu0 0.0
    %60 = vmatpush.msra.mxu0 0.0
    %61 = vmatpush.msra.mxu0 0.0
    %62 = vmatpush.msra.mxu0 %v38
    %63 = vmatpush.msra.mxu0 %v37
    %64 = vmatpush.msra.mxu0 %v36
    %65 = vmatpush.msra.mxu0 %v35
    %66 = vmatmul.f32.gmra.mxu0 %v45
    %v67 = vpop.f32.mrf.mxu0
    %v68 = vadd.f32 %v41, %v67
    %69 = vmatmul.f32.gmra.mxu0 %v48
    %v70 = vpop.f32.mrf.mxu0
    %v71 = vadd.f32 %v41, %v70
    %72 = vdwg.mxu0
    %vm73 = vcmask 64512
    %v74 = vsel %vm73, %v68, -inf
    %75 = vmax.xlane.f32.xlu0 %v74
    %v76 = vpop.xlane.xlu0 %75
    %v77 = vsel %vm73, %v71, -inf
    %78 = vmax.xlane.f32.xlu0 %v77
    %v79 = vpop.xlane.xlu0 %78
    %v80 = vsub.f32 %v68, %v76
    %v81 = vsub.f32 %v71, %v79
    %v82 = vmul.f32 %v80, 1.442695
    %v83 = vpow.pop %v82
    %v84 = vmul.f32 %v81, 1.442695
    %v85 = vpow.pop %v84
    %v86 = vsel %vm73, %v83, 0.0
    %87 = vadd.xlane.f32.xlu0 %v86
    %v88 = vpop.xlane.xlu0 %87
    %v89 = vsel %vm73, %v85, 0.0
    %90 = vadd.xlane.f32.xlu0 %v89
    %v91 = vpop.xlane.xlu0 %90
    %v92 = vrcp.pop %v88
    %v93 = vrcp.pop %v91
    %v94 = vmul.f32 %v83, %v92
    %v95 = vmul.f32 %v85, %v93
    %v96 = vld [vmem:[%s3] sm:$0xff]
    %v97 = vld [vmem:[%s3 + $0x8] sm:$0xff]
    %v98 = vld [vmem:[%s3 + $0x10] sm:$0xff]
    %v99 = vld [vmem:[%s3 + $0x18] sm:$0xff]
    %100 = vmatpush.msra.mxu0 0.0
    %101 = vmatpush.msra.mxu0 0.0
    %102 = vmatpush.msra.mxu0 0.0
    %103 = vmatpush.msra.mxu0 0.0
    %104 = vmatpush.msra.mxu0 0.0
    %105 = vmatpush.msra.mxu0 0.0
    %106 = vmatpush.msra.mxu0 0.0
    %107 = vmatpush.msra.mxu0 0.0
    %108 = vmatpush.msra.mxu0 0.0
    %109 = vmatpush.msra.mxu0 0.0
    %110 = vmatpush.msra.mxu0 0.0
    %111 = vmatpush.msra.mxu0 0.0
    %112 = vmatpush.msra.mxu0 %v99
    %113 = vmatpush.msra.mxu0 %v98
    %114 = vmatpush.msra.mxu0 %v97
    %115 = vmatpush.msra.mxu0 %v96
    %116 = vmatmul.f32.gmra.mxu0 %v45
    %v117 = vpop.f32.mrf.mxu0
    %v118 = vadd.f32 0.0, %v117
    %119 = vmatmul.f32.gmra.mxu0 %v48
    %v120 = vpop.f32.mrf.mxu0
    %v121 = vadd.f32 0.0, %v120
    %122 = vdwg.mxu0
    %v123 = vld [vmem:[%s4] sm:$0xff]
    %v125 = vsel %vm73, %v94, 0
    %v128 = vsel %vm73, %v95, 0
    %130 = vmatpush.msra.mxu0 0.0
    %131 = vmatpush.msra.mxu0 0.0
    %132 = vmatpush.msra.mxu0 0.0
    %133 = vmatpush.msra.mxu0 0.0
    %134 = vmatpush.msra.mxu0 0.0
    %135 = vmatpush.msra.mxu0 0.0
    %136 = vmatpush.msra.mxu0 0.0
    %137 = vmatpush.msra.mxu0 0.0
    %138 = vmatpush.msra.mxu0 0.0
    %139 = vmatpush.msra.mxu0 0.0
    %140 = vmatpush.msra.mxu0 0.0
    %141 = vmatpush.msra.mxu0 0.0
    %142 = vmatpush.msra.mxu0 0.0
    %143 = vmatpush.msra.mxu0 0.0
    %144 = vmatpush.msra.mxu0 0.0
    %145 = vmatpush.msra.mxu0 %v123
    %146 = vmatmul.f32.gmra.mxu0 %v125
    %v147 = vpop.f32.mrf.mxu0
    %v148 = vadd.f32 0.0, %v147
    %149 = vmatmul.f32.gmra.mxu0 %v128
    %v150 = vpop.f32.mrf.mxu0
    %v151 = vadd.f32 0.0, %v150
    %152 = vdwg.mxu0
    %v153 = vmul.f32 %v118, %v148
    %v154 = vmul.f32 %v121, %v151
    %v155 = vld [vmem:[%s5] sm:$0xff]
    %v156 = vld [vmem:[%s5 + $0x8] sm:$0xff]
    %v157 = vld [vmem:[%s5 + $0x10] sm:$0xff]
    %v158 = vld [vmem:[%s5 + $0x18] sm:$0xff]
    %v159 = vld [vmem:[%s5 + $0x20] sm:$0xff]
    %v160 = vld [vmem:[%s5 + $0x28] sm:$0xff]
    %v161 = vld [vmem:[%s5 + $0x30] sm:$0xff]
    %v162 = vld [vmem:[%s5 + $0x38] sm:$0xff]
    %v163 = vld [vmem:[%s6] sm:$0xff]
    %164 = vmatpush.msra.mxu0 0.0
    %165 = vmatpush.msra.mxu0 0.0
    %166 = vmatpush.msra.mxu0 0.0
    %167 = vmatpush.msra.mxu0 0.0
    %168 = vmatpush.msra.mxu0 0.0
    %169 = vmatpush.msra.mxu0 0.0
    %170 = vmatpush.msra.mxu0 0.0
    %171 = vmatpush.msra.mxu0 0.0
    %172 = vmatpush.msra.mxu0 0.0
    %173 = vmatpush.msra.mxu0 0.0
    %174 = vmatpush.msra.mxu0 0.0
    %175 = vmatpush.msra.mxu0 0.0
    %176 = vmatpush.msra.mxu0 0.0
    %177 = vmatpush.msra.mxu0 0.0
    %178 = vmatpush.msra.mxu0 0.0
    %179 = vmatpush.msra.mxu0 %v163
    %180 = vmatmul.f32.gmra.mxu0 %v125
    %v181 = vpop.f32.mrf.mxu0
    %v182 = vadd.f32 0.0, %v181
    %183 = vmatmul.f32.gmra.mxu0 %v128
    %v184 = vpop.f32.mrf.mxu0
    %v185 = vadd.f32 0.0, %v184
    %186 = vdwg.mxu0
    %vm187 = vcmask 523264
    %v189 = vsel %vm187, %v153, 0
    %v192 = vsel %vm187, %v154, 0
    %194 = vmatpush.msra.mxu0 0.0
    %195 = vmatpush.msra.mxu0 0.0
    %196 = vmatpush.msra.mxu0 0.0
    %197 = vmatpush.msra.mxu0 0.0
    %198 = vmatpush.msra.mxu0 0.0
    %199 = vmatpush.msra.mxu0 0.0
    %200 = vmatpush.msra.mxu0 0.0
    %201 = vmatpush.msra.mxu0 0.0
    %202 = vmatpush.msra.mxu0 %v162
    %203 = vmatpush.msra.mxu0 %v161
    %204 = vmatpush.msra.mxu0 %v160
    %205 = vmatpush.msra.mxu0 %v159
    %206 = vmatpush.msra.mxu0 %v158
    %207 = vmatpush.msra.mxu0 %v157
    %208 = vmatpush.msra.mxu0 %v156
    %209 = vmatpush.msra.mxu0 %v155
    %210 = vmatmul.f32.gmra.mxu0 %v189
    %v211 = vpop.f32.mrf.mxu0
    %v212 = vadd.f32 %v182, %v211
    %213 = vmatmul.f32.gmra.mxu0 %v192
    %v214 = vpop.f32.mrf.mxu0
    %v215 = vadd.f32 %v185, %v214
    %216 = vdwg.mxu0
    %v217 = vmax.f32 %v212, 0.0
    %v218 = vmax.f32 %v215, 0.0
    %v219 = vld [vmem:[%s7] sm:$0xff]
    %v220 = vld [vmem:[%s8] sm:$0x1]
    %v222 = vperm.slane %v220, 0
    %v225 = vsel %vm73, %v217, 0
    %v228 = vsel %vm73, %v218, 0
    %230 = vmatpush.msra.mxu0 0.0
    %231 = vmatpush.msra.mxu0 0.0
    %232 = vmatpush.msra.mxu0 0.0
    %233 = vmatpush.msra.mxu0 0.0
    %234 = vmatpush.msra.mxu0 0.0
    %235 = vmatpush.msra.mxu0 0.0
    %236 = vmatpush.msra.mxu0 0.0
    %237 = vmatpush.msra.mxu0 0.0
    %238 = vmatpush.msra.mxu0 0.0
    %239 = vmatpush.msra.mxu0 0.0
    %240 = vmatpush.msra.mxu0 0.0
    %241 = vmatpush.msra.mxu0 0.0
    %242 = vmatpush.msra.mxu0 0.0
    %243 = vmatpush.msra.mxu0 0.0
    %244 = vmatpush.msra.mxu0 0.0
    %245 = vmatpush.msra.mxu0 %v219
    %246 = vmatmul.f32.gmra.mxu0 %v225
    %v247 = vpop.f32.mrf.mxu0
    %v248 = vadd.f32 %v222, %v247
    %249 = vmatmul.f32.gmra.mxu0 %v228
    %v250 = vpop.f32.mrf.mxu0
    %v251 = vadd.f32 %v222, %v250
    %252 = vdwg.mxu0
    %253 = vst.msk [vmem:[#allocation2] sm:$0xff] %vm43, %v248
    %254 = vst.msk [vmem:[#allocation2 + $0x8] sm:$0xff] %vm43, %v251
    // Predicated region
    $region38: #{tpu_custom_call.1} parent=1 // pred_check
      _
    $region39: #{tpu_custom_call.1} parent=1 // pred_check_branch
      %256 = sbr.rel (0) target = $region41
    $region40: #{tpu_custom_call.1} parent=1 // pred_region
      %258 = vsyncadd [#allocation3], 0
      %s259 = sshll.u32 [#allocation2], 4
      %s260 = int_to_ptr.vmem [resolvable:$true] %s259
      %s261 = sshll.u32 %s9, 4
      %s262 = int_to_ptr.hbm [resolvable:$true] %s261
      %267 = dma.vmem_to_hbm [thread:$0]  %s260, 256, %s262, [#allocation3], 128, 128, 8
    $region41: #{tpu_custom_call.1} parent=1 // pred_fallthru
      _
    // Predicated region
    $region42: #{tpu_custom_call.1} parent=1 // pred_check
      _
    $region43: #{tpu_custom_call.1} parent=1 // pred_check_branch
      %269 = sbr.rel (0) target = $region45
    $region44: #{tpu_custom_call.1} parent=1 // pred_region
      %271 = dma.done [#allocation3], 256
    $region45: #{tpu_custom_call.1} parent=1 // pred_fallthru
      _
    %272 = vsyncpa [#allocation3], 1

</llo_original>
